<compile_context>
chip_gen: v7x
topology: tpu7x:2x2x1
jax: 0.10.0
libtpu: 0.0.40
codegen_flags: <defaults>
</compile_context>

<pallas_src>
import functools

import jax
import jax.numpy as jnp
from jax import lax
from jax.experimental import pallas as pl
from jax.experimental.pallas import tpu as pltpu


# ----------------------------- host-side tree helpers -----------------------------
def func_L(w):
    count = 1
    while w != 1:
        count += 1
        w //= 2
    return count


def func_n(w, j):
    li = [w]
    while w != 1:
        w = w // 2
        li.append(w)
    li.reverse()
    return li[j]


def _path_nodes_and_mults(size_vertex, wo):
    """Static (python-int) walk of the binary tree, mirroring forward() exactly."""
    w = size_vertex + int(wo)
    nodes, mults = [], []
    for j in range(1, func_L(w) - 1):
        mult = 1 if func_n(w, j + 1) == 2 * func_n(w, j) else -1
        nodes.append(func_n(w, j))
        mults.append(mult)
    return nodes, mults


def _max_path_len(size_vertex):
    """Max path length over all wo in [0, size_vertex)."""
    return max(0, (2 * size_vertex - 1).bit_length() - 2)


# ----------------------------------- kernel ---------------------------------------
def _hs_kernel(tb, k_max,                  # static python ints (closure)
               wi_ref, idx_ref,            # SMEM prefetch: (B_pad,), (B_pad*K,) int32
               phi_ref, prob_ref,          # VMEM resident: (V, D), (V, D) f32
               mult_ref,                   # VMEM block (1, TB, K) f32: +1/-1, 0 = pad
               out_ref,                    # VMEM block (1, 1, TB) f32 (lane-dense)
               h_buf, rows_buf):           # VMEM scratch: (TB, D), (K*TB, D) f32
    base = pl.program_id(0) * tb

    # ---- phase 1: gather — in-VMEM dynamic row reads from the resident tables ----
    @pl.loop(0, tb)
    def _(t):
        pair = base + t
        wi = wi_ref[pair]
        h_buf[pl.ds(t, 1), :] = phi_ref[pl.ds(wi, 1), :]
        for k in range(k_max):                 # static, small (~log2 V)
            node = idx_ref[pair * k_max + k]   # padded slots point at row 0 (in bounds)
            rows_buf[pl.ds(k * tb + t, 1), :] = prob_ref[pl.ds(node, 1), :]

    # ---- phase 2: vectorized path scoring over the whole TB chunk ----
    h = h_buf[...]                             # (TB, D)
    m = mult_ref[0]                            # (TB, K)
    acc = jnp.zeros((tb, 1), dtype=jnp.float32)
    for k in range(k_max):
        rows_k = rows_buf[k * tb:(k + 1) * tb, :]              # (TB, D)
        d_k = jnp.sum(rows_k * h, axis=-1, keepdims=True)      # (TB, 1) dot products
        m_k = m[:, k:k + 1]                                    # (TB, 1)
        x = m_k * d_k
        # stable log(sigmoid(x)) = min(x, 0) - log1p(exp(-|x|))
        log_sig = jnp.minimum(x, 0.0) - jnp.log1p(jnp.exp(-jnp.abs(x)))
        acc = acc + jnp.where(m_k != 0.0, log_sig, 0.0)        # pad steps -> factor 1.0
    p = jnp.exp(acc)                           # (TB, 1) product of sigmoids

    # ---- relayout (TB,1) sublane-major -> (1,TB) lane-dense (diag-scatter + reduce) ----
    rows_i = lax.broadcasted_iota(jnp.int32, (tb, tb), 0)
    cols_i = lax.broadcasted_iota(jnp.int32, (tb, tb), 1)
    out_ref[0] = jnp.sum(jnp.where(rows_i == cols_i, p, 0.0), axis=0, keepdims=True)


# ---------------------------------- wrappers ----------------------------------------
def hierarchical_model_forward_batch(phi, prob_tensor, wi_list, wo_list, *, tb=128):
    """Batched HierarchicalModel.forward over B (wi, wo) pairs. Returns shape (B,)."""
    size_vertex, dim = phi.shape
    B = len(wi_list)
    assert len(wo_list) == B
    if B == 0:
        return jnp.zeros((0,), dtype=jnp.float32)

    k_max = _max_path_len(size_vertex)
    if k_max == 0:
        # degenerate tree (size_vertex <= 2): product over an empty path
        return jnp.ones((B,), dtype=jnp.float32)

    phi = jnp.asarray(phi, jnp.float32)
    # only rows [0, size_vertex) of prob_tensor can appear on a path -> halve residency
    prob_used = jnp.asarray(prob_tensor, jnp.float32)[:size_vertex]

    num_chunks = -(-B // tb)
    b_pad = num_chunks * tb

    wi_host = [int(w) for w in wi_list] + [0] * (b_pad - B)
    idx_host, mult_host = [], []
    for wo in list(wo_list) + [0] * (b_pad - B):
        nodes, ms = _path_nodes_and_mults(size_vertex, int(wo))
        assert len(nodes) <= k_max
        idx_host.append(list(nodes) + [0] * (k_max - len(nodes)))
        mult_host.append([float(v) for v in ms] + [0.0] * (k_max - len(ms)))

    wi_arr = jnp.asarray(wi_host, dtype=jnp.int32)                       # (B_pad,)
    idx_arr = jnp.asarray(idx_host, dtype=jnp.int32).reshape(-1)         # (B_pad*K,) 1D SMEM
    mult_arr = jnp.asarray(mult_host, dtype=jnp.float32).reshape(num_chunks, tb, k_max)

    grid_spec = pltpu.PrefetchScalarGridSpec(
        num_scalar_prefetch=2,                   # wi indices + flattened path nodes -> SMEM
        grid=(num_chunks,),
        in_specs=[
            pl.BlockSpec((size_vertex, dim), lambda c, wi, idx: (0, 0)),  # phi VMEM-resident
            pl.BlockSpec((size_vertex, dim), lambda c, wi, idx: (0, 0)),  # prob[:V] resident
            pl.BlockSpec((1, tb, k_max), lambda c, wi, idx: (c, 0, 0)),   # per-chunk signs
        ],
        out_specs=pl.BlockSpec((1, 1, tb), lambda c, wi, idx: (c, 0, 0)), # lane-dense out
        scratch_shapes=[
            pltpu.VMEM((tb, dim), jnp.float32),            # gathered phi rows (h)
            pltpu.VMEM((k_max * tb, dim), jnp.float32),    # gathered prob rows per level
        ],
    )

    # VMEM budgeting: resident tables (double-buffered) + gather scratch + streamed blocks.
    est = (2 * phi.size * 4 + 2 * prob_used.size * 4
           + (k_max + 1) * tb * dim * 4
           + 2 * tb * 128 * 4 + 2 * 8 * 128 * 4)
    vmem_limit = None
    if est > 16 * 1024 * 1024:
        # cap at 48 MiB so the same setting stays legal on v7x (64 MiB physical VMEM/TC)
        vmem_limit = min(int(est * 1.25), 48 * 1024 * 1024)
        # TODO(synk): for tables larger than ~48 MiB, add a double-buffered HBM-gather
        # fallback instead of keeping them VMEM-resident.

    out = pl.pallas_call(
        functools.partial(_hs_kernel, tb, k_max),
        out_shape=jax.ShapeDtypeStruct((num_chunks, 1, tb), jnp.float32),
        grid_spec=grid_spec,
        compiler_params=pltpu.CompilerParams(
            dimension_semantics=("parallel",),     # chunks shard across TCs on v7x
            vmem_limit_bytes=vmem_limit),
    )(wi_arr, idx_arr, phi, prob_used, mult_arr)

    return out.reshape(b_pad)[:B]


def hierarchical_model_forward(phi, prob_tensor, wi, wo):
    """Single-pair API matching HierarchicalModel.forward(wi, wo); returns shape (1,)."""
    return hierarchical_model_forward_batch(phi, prob_tensor, [wi], [wo]).reshape(1)


# ------------------------------ pure-JAX reference ----------------------------------
def _reference_forward(phi, prob_tensor, wi, wo):
    size_vertex = phi.shape[0]
    h = phi[int(wi)]
    p = jnp.float32(1.0)
    nodes, mults = _path_nodes_and_mults(size_vertex, int(wo))
    for n, m in zip(nodes, mults):
        p = p * jax.nn.sigmoid(m * jnp.dot(prob_tensor[n], h))
    return jnp.asarray(p, dtype=jnp.float32)


# ------------------------------------- main -----------------------------------------
if __name__ == "__main__":
    key = jax.random.PRNGKey(0)
    k1, k2, k3, k4 = jax.random.split(key, 4)

    # ---- test 1: power-of-two vertex count, dim = 128 (lane-dense rows) ----
    size_vertex, dim = 8, 128
    # symmetric uniform init keeps sigmoids away from saturation (semantics init-independent)
    phi = jax.random.uniform(k1, (size_vertex, dim), jnp.float32, -0.5, 0.5)
    prob_tensor = jax.random.uniform(k2, (2 * size_vertex, dim), jnp.float32, -0.5, 0.5)

    wi_list = [3, 0, 7, 5]
    wo_list = [5, 1, 2, 0]
    p_batch = jax.block_until_ready(
        hierarchical_model_forward_batch(phi, prob_tensor, wi_list, wo_list))
    assert p_batch.shape == (len(wi_list),)
    for b, (wi, wo) in enumerate(zip(wi_list, wo_list)):
        p_ref = _reference_forward(phi, prob_tensor, wi, wo)
        assert jnp.allclose(p_batch[b], p_ref, rtol=1e-5, atol=1e-6), (b, p_batch[b], p_ref)

    # ---- test 2: non-power-of-two vertex count -> variable path lengths (padding) ----
    size_vertex2, dim2 = 11, 128
    phi2 = jax.random.uniform(k3, (size_vertex2, dim2), jnp.float32, -0.5, 0.5)
    prob2 = jax.random.uniform(k4, (2 * size_vertex2, dim2), jnp.float32, -0.5, 0.5)
    wi2 = [0, 10, 4, 7, 2, 9]
    wo2 = [10, 0, 6, 3, 8, 5]
    p2 = jax.block_until_ready(hierarchical_model_forward_batch(phi2, prob2, wi2, wo2))
    assert p2.shape == (len(wi2),)
    for b, (wi, wo) in enumerate(zip(wi2, wo2)):
        p_ref = _reference_forward(phi2, prob2, wi, wo)
        assert jnp.allclose(p2[b], p_ref, rtol=1e-5, atol=1e-6), (b, p2[b], p_ref)

    # ---- single-pair call, matching the original module's forward(wi, wo) -> shape (1,) ----
    p1 = jax.block_until_ready(hierarchical_model_forward(phi, prob_tensor, 3, 5))
    assert p1.shape == (1,)
    assert jnp.allclose(p1[0], _reference_forward(phi, prob_tensor, 3, 5),
                        rtol=1e-5, atol=1e-6), (p1, _reference_forward(phi, prob_tensor, 3, 5))

    print("KERNEL_OK")
</pallas_src>

<mosaic_0001>
module attributes {stable_mosaic.version = 11 : i64} {
  func.func @_hs_kernel(%arg0: i32, %arg1: memref<128xi32, #tpu.memory_space<smem>>, %arg2: memref<256xi32, #tpu.memory_space<smem>>, %arg3: memref<8x128xf32, #tpu.memory_space<vmem>>, %arg4: memref<8x128xf32, #tpu.memory_space<vmem>>, %arg5: memref<1x128x2xf32, #tpu.memory_space<vmem>>, %arg6: memref<1x1x128xf32, #tpu.memory_space<vmem>>, %arg7: memref<128x128xf32, #tpu.memory_space<vmem>>, %arg8: memref<256x128xf32, #tpu.memory_space<vmem>>) attributes {dimension_semantics = [#tpu.dimension_semantics<parallel>], iteration_bounds = array<i64: 1>, scalar_prefetch = 2 : i64, scratch_operands = 2 : i64, tpu.core_type = #tpu.core_type<tc>, window_params = [{pipeline_mode = #tpu.pipeline_mode<synchronous>, transform_indices = @transform_0, window_bounds = array<i64: 8, 128>}, {pipeline_mode = #tpu.pipeline_mode<synchronous>, transform_indices = @transform_1, window_bounds = array<i64: 8, 128>}, {transform_indices = @transform_2, window_bounds = array<i64: 1, 128, 2>}, {transform_indices = @transform_3, window_bounds = array<i64: 1, 1, 128>}]} {
    %c128_i32 = arith.constant 128 : i32
    %0 = arith.muli %arg0, %c128_i32 : i32
    %c0_i32 = arith.constant 0 : i32
    %c128_i32_0 = arith.constant 128 : i32
    %1 = arith.addi %c0_i32, %c128_i32_0 : i32
    %c1_i32 = arith.constant 1 : i32
    scf.for %arg9 = %c0_i32 to %1 step %c1_i32  : i32 {
      %c1_i32_24 = arith.constant 1 : i32
      %57 = arith.muli %arg9, %c1_i32_24 : i32
      %c0_i32_25 = arith.constant 0 : i32
      %58 = arith.addi %c0_i32_25, %57 : i32
      %59 = arith.addi %0, %58 : i32
      %60 = arith.index_cast %59 : i32 to index
      %61 = memref.load %arg1[%60] : memref<128xi32, #tpu.memory_space<smem>>
      %62 = arith.index_cast %61 : i32 to index
      %c0_26 = arith.constant 0 : index
      %63 = vector.load %arg3[%62, %c0_26] : memref<8x128xf32, #tpu.memory_space<vmem>>, vector<1x128xf32>
      %64 = arith.index_cast %58 : i32 to index
      %c0_27 = arith.constant 0 : index
      %65 = vector.load %arg7[%64, %c0_27] : memref<128x128xf32, #tpu.memory_space<vmem>>, vector<1x128xf32>
      tpu.vector_store %arg7[%64, %c0_27], %63 {strides = array<i32>} : memref<128x128xf32, #tpu.memory_space<vmem>>, vector<1x128xf32>,
      %c2_i32 = arith.constant 2 : i32
      %66 = arith.muli %59, %c2_i32 : i32
      %c0_i32_28 = arith.constant 0 : i32
      %67 = arith.addi %66, %c0_i32_28 : i32
      %68 = arith.index_cast %67 : i32 to index
      %69 = memref.load %arg2[%68] : memref<256xi32, #tpu.memory_space<smem>>
      %70 = arith.index_cast %69 : i32 to index
      %c0_29 = arith.constant 0 : index
      %71 = vector.load %arg4[%70, %c0_29] : memref<8x128xf32, #tpu.memory_space<vmem>>, vector<1x128xf32>
      %c0_i32_30 = arith.constant 0 : i32
      %72 = arith.addi %c0_i32_30, %58 : i32
      %73 = arith.index_cast %72 : i32 to index
      %c0_31 = arith.constant 0 : index
      %74 = vector.load %arg8[%73, %c0_31] : memref<256x128xf32, #tpu.memory_space<vmem>>, vector<1x128xf32>
      tpu.vector_store %arg8[%73, %c0_31], %71 {strides = array<i32>} : memref<256x128xf32, #tpu.memory_space<vmem>>, vector<1x128xf32>,
      %c2_i32_32 = arith.constant 2 : i32
      %75 = arith.muli %59, %c2_i32_32 : i32
      %c1_i32_33 = arith.constant 1 : i32
      %76 = arith.addi %75, %c1_i32_33 : i32
      %77 = arith.index_cast %76 : i32 to index
      %78 = memref.load %arg2[%77] : memref<256xi32, #tpu.memory_space<smem>>
      %79 = arith.index_cast %78 : i32 to index
      %c0_34 = arith.constant 0 : index
      %80 = vector.load %arg4[%79, %c0_34] : memref<8x128xf32, #tpu.memory_space<vmem>>, vector<1x128xf32>
      %c128_i32_35 = arith.constant 128 : i32
      %81 = arith.addi %c128_i32_35, %58 : i32
      %82 = arith.index_cast %81 : i32 to index
      %c0_36 = arith.constant 0 : index
      %83 = vector.load %arg8[%82, %c0_36] : memref<256x128xf32, #tpu.memory_space<vmem>>, vector<1x128xf32>
      tpu.vector_store %arg8[%82, %c0_36], %80 {strides = array<i32>} : memref<256x128xf32, #tpu.memory_space<vmem>>, vector<1x128xf32>,
    }
    %c128_i32_1 = arith.constant 128 : i32
    %c0 = arith.constant 0 : index
    %c0_2 = arith.constant 0 : index
    %2 = vector.load %arg7[%c0, %c0_2] : memref<128x128xf32, #tpu.memory_space<vmem>>, vector<128x128xf32>
    %c0_3 = arith.constant 0 : index
    %c0_4 = arith.constant 0 : index
    %c0_5 = arith.constant 0 : index
    %3 = vector.load %arg5[%c0_3, %c0_4, %c0_5] : memref<1x128x2xf32, #tpu.memory_space<vmem>>, vector<1x128x2xf32>
    %4 = vector.shape_cast %3 : vector<1x128x2xf32> to vector<128x2xf32>
    %cst = arith.constant 0.000000e+00 : f32
    %5 = vector.broadcast %cst : f32 to vector<128x1xf32>
    %c0_6 = arith.constant 0 : index
    %c0_7 = arith.constant 0 : index
    %6 = vector.load %arg8[%c0_6, %c0_7] : memref<256x128xf32, #tpu.memory_space<vmem>>, vector<128x128xf32>
    %7 = arith.mulf %6, %2 : vector<128x128xf32>
    %cst_8 = arith.constant dense<0.000000e+00> : vector<128xf32>
    %8 = vector.multi_reduction <add>, %7, %cst_8 [1] : vector<128x128xf32> to vector<128xf32>
    %9 = vector.shape_cast %8 : vector<128xf32> to vector<128x1xf32>
    %10 = vector.extract_strided_slice %4 {offsets = [0, 0], sizes = [128, 1], strides = [1, 1]} : vector<128x2xf32> to vector<128x1xf32>
    %11 = arith.mulf %10, %9 : vector<128x1xf32>
    %cst_9 = arith.constant 0.000000e+00 : f32
    %12 = vector.broadcast %cst_9 : f32 to vector<128x1xf32>
    %13 = arith.minimumf %11, %12 : vector<128x1xf32>
    %14 = math.absf %11 : vector<128x1xf32>
    %cst_10 = arith.constant 0.000000e+00 : f32
    %15 = vector.broadcast %cst_10 : f32 to vector<128x1xf32>
    %16 = arith.subf %15, %14 : vector<128x1xf32>
    %17 = math.exp %16 : vector<128x1xf32>
    %18 = math.log1p %17 : vector<128x1xf32>
    %19 = arith.subf %13, %18 : vector<128x1xf32>
    %cst_11 = arith.constant 0.000000e+00 : f32
    %20 = vector.broadcast %cst_11 : f32 to vector<128x1xf32>
    %21 = arith.cmpf one, %10, %20 : vector<128x1xf32>
    %cst_12 = arith.constant 0.000000e+00 : f32
    %22 = vector.broadcast %cst_12 : f32 to vector<128x1xf32>
    %23 = arith.select %21, %19, %22 : vector<128x1xi1>, vector<128x1xf32>
    %24 = arith.addf %5, %23 : vector<128x1xf32>
    %c128 = arith.constant 128 : index
    %c0_13 = arith.constant 0 : index
    %25 = vector.load %arg8[%c128, %c0_13] : memref<256x128xf32, #tpu.memory_space<vmem>>, vector<128x128xf32>
    %26 = arith.mulf %25, %2 : vector<128x128xf32>
    %cst_14 = arith.constant dense<0.000000e+00> : vector<128xf32>
    %27 = vector.multi_reduction <add>, %26, %cst_14 [1] : vector<128x128xf32> to vector<128xf32>
    %28 = vector.shape_cast %27 : vector<128xf32> to vector<128x1xf32>
    %29 = vector.extract_strided_slice %4 {offsets = [0, 1], sizes = [128, 1], strides = [1, 1]} : vector<128x2xf32> to vector<128x1xf32>
    %30 = arith.mulf %29, %28 : vector<128x1xf32>
    %cst_15 = arith.constant 0.000000e+00 : f32
    %31 = vector.broadcast %cst_15 : f32 to vector<128x1xf32>
    %32 = arith.minimumf %30, %31 : vector<128x1xf32>
    %33 = math.absf %30 : vector<128x1xf32>
    %cst_16 = arith.constant 0.000000e+00 : f32
    %34 = vector.broadcast %cst_16 : f32 to vector<128x1xf32>
    %35 = arith.subf %34, %33 : vector<128x1xf32>
    %36 = math.exp %35 : vector<128x1xf32>
    %37 = math.log1p %36 : vector<128x1xf32>
    %38 = arith.subf %32, %37 : vector<128x1xf32>
    %cst_17 = arith.constant 0.000000e+00 : f32
    %39 = vector.broadcast %cst_17 : f32 to vector<128x1xf32>
    %40 = arith.cmpf one, %29, %39 : vector<128x1xf32>
    %cst_18 = arith.constant 0.000000e+00 : f32
    %41 = vector.broadcast %cst_18 : f32 to vector<128x1xf32>
    %42 = arith.select %40, %38, %41 : vector<128x1xi1>, vector<128x1xf32>
    %43 = arith.addf %24, %42 : vector<128x1xf32>
    %44 = math.exp %43 : vector<128x1xf32>
    %45 = tpu.iota {dimensions = array<i32: 0>} : vector<128x128xi32>
    %46 = tpu.iota {dimensions = array<i32: 1>} : vector<128x128xi32>
    %47 = arith.cmpi eq, %45, %46 : vector<128x128xi32>
    %cst_19 = arith.constant 0.000000e+00 : f32
    %48 = vector.shape_cast %44 : vector<128x1xf32> to vector<128x1xf32>
    %49 = vector.broadcast %48 : vector<128x1xf32> to vector<128x128xf32>
    %50 = vector.broadcast %cst_19 : f32 to vector<128x128xf32>
    %51 = arith.select %47, %49, %50 : vector<128x128xi1>, vector<128x128xf32>
    %cst_20 = arith.constant dense<0.000000e+00> : vector<128xf32>
    %52 = vector.multi_reduction <add>, %51, %cst_20 [0] : vector<128x128xf32> to vector<128xf32>
    %53 = vector.shape_cast %52 : vector<128xf32> to vector<1x128xf32>
    %c0_21 = arith.constant 0 : index
    %c0_22 = arith.constant 0 : index
    %c0_23 = arith.constant 0 : index
    %54 = vector.load %arg6[%c0_21, %c0_22, %c0_23] : memref<1x1x128xf32, #tpu.memory_space<vmem>>, vector<1x1x128xf32>
    %55 = vector.shape_cast %54 : vector<1x1x128xf32> to vector<1x128xf32>
    %56 = vector.shape_cast %53 : vector<1x128xf32> to vector<1x1x128xf32>
    tpu.vector_store %arg6[%c0_21, %c0_22, %c0_23], %56 {strides = array<i32>} : memref<1x1x128xf32, #tpu.memory_space<vmem>>, vector<1x1x128xf32>,
    return
  }
  func.func @transform_0(%arg0: i32, %arg1: memref<128xi32, #tpu.memory_space<smem>>, %arg2: memref<256xi32, #tpu.memory_space<smem>>) -> (i32, i32) {
    %c0_i32 = arith.constant 0 : i32
    %c0_i32_0 = arith.constant 0 : i32
    %c0_i32_1 = arith.constant 0 : i32
    return %c0_i32, %c0_i32_0 : i32, i32
  }
  func.func @transform_1(%arg0: i32, %arg1: memref<128xi32, #tpu.memory_space<smem>>, %arg2: memref<256xi32, #tpu.memory_space<smem>>) -> (i32, i32) {
    %c0_i32 = arith.constant 0 : i32
    %c0_i32_0 = arith.constant 0 : i32
    %c0_i32_1 = arith.constant 0 : i32
    return %c0_i32, %c0_i32_0 : i32, i32
  }
  func.func @transform_2(%arg0: i32, %arg1: memref<128xi32, #tpu.memory_space<smem>>, %arg2: memref<256xi32, #tpu.memory_space<smem>>) -> (i32, i32, i32) {
    %c0_i32 = arith.constant 0 : i32
    %c0_i32_0 = arith.constant 0 : i32
    %c0_i32_1 = arith.constant 0 : i32
    return %arg0, %c0_i32, %c0_i32_0 : i32, i32, i32
  }
  func.func @transform_3(%arg0: i32, %arg1: memref<128xi32, #tpu.memory_space<smem>>, %arg2: memref<256xi32, #tpu.memory_space<smem>>) -> (i32, i32, i32) {
    %c0_i32 = arith.constant 0 : i32
    %c0_i32_0 = arith.constant 0 : i32
    %c0_i32_1 = arith.constant 0 : i32
    return %arg0, %c0_i32, %c0_i32_0 : i32, i32, i32
  }
}

</mosaic_0001>

<llo_original>
// kernel: tpu_custom_call.1
$region0: #{tpu_custom_call.1}
  #allocation0 [shape = 'u32[]', space=smem, size = 0x4, offset = 0x4, fixed_abs, tag = 'smem constant byte address 0x4 - core index']
  #allocation1 [shape = 'u32[144,128]{1,0:T(1,128)}', space=vmem, size = 0x12000, scoped, tag = 'internal scratch']
  #allocation2 [shape = 'f32[128,128]{1,0:T(8,128)}', space=vmem, size = 0x10000, scoped, tag = 'scratch operand']
  #allocation3 [shape = 'f32[256,128]{1,0:T(8,128)}', space=vmem, size = 0x20000, scoped, tag = 'scratch operand']
  #allocation4 [shape = 's32[1]{0}', space=sflag, size = 0x4, scoped, tag = 'scoped memory for tpu_custom_call.1']
  #allocation5 [shape = 'u8[512]{0}', space=smem, size = 0x200, scoped, tag = 'prefetched SMEM operand 0']
  #allocation6 [shape = 'u8[1024]{0}', space=smem, size = 0x400, scoped, tag = 'prefetched SMEM operand 1']
  %s0 = inlined_call_operand.vmem [shape: s32[128], index: 0, kind: input, shape index: {}]
  %s1 = inlined_call_operand.vmem [shape: s32[256], index: 1, kind: input, shape index: {}]
  %s2 = inlined_call_operand.vmem [shape: f32[8,128], index: 2, kind: input, shape index: {}]
  %s3 = inlined_call_operand.vmem [shape: f32[8,128], index: 3, kind: input, shape index: {}]
  %s4 = inlined_call_operand.vmem [shape: f32[1,128,2], index: 4, kind: input, shape index: {}]
  %s5 = inlined_call_operand.hbm [shape: f32[1,1,128], index: 5, kind: output, shape index: {}]
  %s6 = sld [smem:[#allocation0]]
  $region29: #{tpu_custom_call.1} parent=0
    _
  %s8 = ssub.s32 1, %s6
  %s9 = scalar_select 0, %s8, %s6
  %s10 = sshll.u32 %s0, 4
  %s11 = int_to_ptr.vmem [resolvable:$true] %s10
  %13 = dma.vmem_to_smem %s11, 16, [#allocation5], [#allocation4]
  %s14 = sshll.u32 %s1, 4
  %s15 = int_to_ptr.vmem [resolvable:$true] %s14
  %17 = dma.vmem_to_smem %s15, 32, [#allocation6], [#allocation4]
  %18 = dma.done [#allocation4], 48
  %19 = sfence
  $region1: #{tpu_custom_call.1} parent=0
    #allocation7 [shape = 'u8[512]{0}', space=vmem, size = 0x400, scoped, tag = 'output window, operand 0, single buffered']
    #allocation8 [shape = 's32[1]{0}', space=sflag, size = 0x4, scoped, tag = 'scoped memory for tpu_custom_call.1']
    %20 = vsyncpa [#allocation8], 0
    // Predicated region
    $region2: #{tpu_custom_call.1} parent=1 // pred_check
      _
    $region3: #{tpu_custom_call.1} parent=1 // pred_check_branch
      %22 = sbr.rel (0) target = $region5
    $region4: #{tpu_custom_call.1} parent=1 // pred_region
      _
    $region5: #{tpu_custom_call.1} parent=1 // pred_fallthru
      _
    // Predicated region
    $region6: #{tpu_custom_call.1} parent=1 // pred_check
      _
    $region7: #{tpu_custom_call.1} parent=1 // pred_check_branch
      %24 = sbr.rel (0) target = $region9
    $region8: #{tpu_custom_call.1} parent=1 // pred_region
      _
    $region9: #{tpu_custom_call.1} parent=1 // pred_fallthru
      _
    // Predicated region
    $region10: #{tpu_custom_call.1} parent=1 // pred_check
      _
    $region11: #{tpu_custom_call.1} parent=1 // pred_check_branch
      %26 = sbr.rel (0) target = $region13
    $region12: #{tpu_custom_call.1} parent=1 // pred_region
      _
    $region13: #{tpu_custom_call.1} parent=1 // pred_fallthru
      _
    %s27 = smul.u32 0, 128
    loop: start=0, step=1, limit=128
    $region14: #{tpu_custom_call.1} parent=1 // loop_pre_header
      _
    $region15: #{tpu_custom_call.1} parent=1 // loop_header
      %s29 = sphi 0, %s33
      %p30 = scmp.ge.s32.totalorder %s29, 128
    $region16: #{tpu_custom_call.1} parent=1 // loop_header_branch
      %32 = sbr.rel (%p30) target = $region20
    $region17: #{tpu_custom_call.1} parent=1 // loop_body
      %s34 = sadd.s32 %s27, %s29
      %s35 = sld [smem:[#allocation5 + %s34]]
      %s36 = scalar_lea.vmem %s2, %s35
      %v37 = vld [vmem:[%s36] sm:$0x1]
      %s38 = scalar_lea.vmem [#allocation2], %s29
      %39 = vst [vmem:[%s38] sm:$0x1] %v37
      %s40 = smul.u32 %s34, 2
      %s41 = sld [smem:[#allocation6 + %s40]]
      %s42 = scalar_lea.vmem %s3, %s41
      %v43 = vld [vmem:[%s42] sm:$0x1]
      %s44 = scalar_lea.vmem [#allocation3], %s29
      %45 = vst [vmem:[%s44] sm:$0x1] %v43
      %s46 = sadd.s32 %s40, 1
      %s47 = sld [smem:[#allocation6 + %s46]]
      %s48 = scalar_lea.vmem %s3, %s47
      %v49 = vld [vmem:[%s48] sm:$0x1]
      %s50 = sadd.s32 %s29, 128
      %s51 = scalar_lea.vmem [#allocation3], %s50
      %52 = vst [vmem:[%s51] sm:$0x1] %v49
    $region18: #{tpu_custom_call.1} parent=1 // loop_footer
      %s33 = sadd.s32 1, %s29
    $region19: #{tpu_custom_call.1} parent=1 // loop_footer_branch
      %28 = sbr.rel target = $region15
    $region20: #{tpu_custom_call.1} parent=1 // loop_exit
      _
    %v53 = vld [vmem:[#allocation2] sm:$0xff]
    %v54 = vld [vmem:[#allocation2 + $0x8] sm:$0xff]
    %v55 = vld [vmem:[#allocation2 + $0x10] sm:$0xff]
    %v56 = vld [vmem:[#allocation2 + $0x18] sm:$0xff]
    %v57 = vld [vmem:[#allocation2 + $0x20] sm:$0xff]
    %v58 = vld [vmem:[#allocation2 + $0x28] sm:$0xff]
    %v59 = vld [vmem:[#allocation2 + $0x30] sm:$0xff]
    %v60 = vld [vmem:[#allocation2 + $0x38] sm:$0xff]
    %v61 = vld [vmem:[#allocation2 + $0x40] sm:$0xff]
    %v62 = vld [vmem:[#allocation2 + $0x48] sm:$0xff]
    %v63 = vld [vmem:[#allocation2 + $0x50] sm:$0xff]
    %v64 = vld [vmem:[#allocation2 + $0x58] sm:$0xff]
    %v65 = vld [vmem:[#allocation2 + $0x60] sm:$0xff]
    %v66 = vld [vmem:[#allocation2 + $0x68] sm:$0xff]
    %v67 = vld [vmem:[#allocation2 + $0x70] sm:$0xff]
    %v68 = vld [vmem:[#allocation2 + $0x78] sm:$0xff]
    %v69 = vld [vmem:[%s4] sm:$0xff]
    %v70 = vld [vmem:[%s4 + $0x8] sm:$0xff]
    %v71 = vld [vmem:[%s4 + $0x10] sm:$0xff]
    %v72 = vld [vmem:[%s4 + $0x18] sm:$0xff]
    %v73 = vld [vmem:[%s4 + $0x20] sm:$0xff]
    %v74 = vld [vmem:[%s4 + $0x28] sm:$0xff]
    %v75 = vld [vmem:[%s4 + $0x30] sm:$0xff]
    %v76 = vld [vmem:[%s4 + $0x38] sm:$0xff]
    %v77 = vld [vmem:[%s4 + $0x40] sm:$0xff]
    %v78 = vld [vmem:[%s4 + $0x48] sm:$0xff]
    %v79 = vld [vmem:[%s4 + $0x50] sm:$0xff]
    %v80 = vld [vmem:[%s4 + $0x58] sm:$0xff]
    %v81 = vld [vmem:[%s4 + $0x60] sm:$0xff]
    %v82 = vld [vmem:[%s4 + $0x68] sm:$0xff]
    %v83 = vld [vmem:[%s4 + $0x70] sm:$0xff]
    %v84 = vld [vmem:[%s4 + $0x78] sm:$0xff]
    %v85 = vld [vmem:[#allocation3] sm:$0xff]
    %v86 = vld [vmem:[#allocation3 + $0x8] sm:$0xff]
    %v87 = vld [vmem:[#allocation3 + $0x10] sm:$0xff]
    %v88 = vld [vmem:[#allocation3 + $0x18] sm:$0xff]
    %v89 = vld [vmem:[#allocation3 + $0x20] sm:$0xff]
    %v90 = vld [vmem:[#allocation3 + $0x28] sm:$0xff]
    %v91 = vld [vmem:[#allocation3 + $0x30] sm:$0xff]
    %v92 = vld [vmem:[#allocation3 + $0x38] sm:$0xff]
    %v93 = vld [vmem:[#allocation3 + $0x40] sm:$0xff]
    %v94 = vld [vmem:[#allocation3 + $0x48] sm:$0xff]
    %v95 = vld [vmem:[#allocation3 + $0x50] sm:$0xff]
    %v96 = vld [vmem:[#allocation3 + $0x58] sm:$0xff]
    %v97 = vld [vmem:[#allocation3 + $0x60] sm:$0xff]
    %v98 = vld [vmem:[#allocation3 + $0x68] sm:$0xff]
    %v99 = vld [vmem:[#allocation3 + $0x70] sm:$0xff]
    %v100 = vld [vmem:[#allocation3 + $0x78] sm:$0xff]
    %v101 = vmul.f32 %v85, %v53
    %v102 = vmul.f32 %v86, %v54
    %v103 = vmul.f32 %v87, %v55
    %v104 = vmul.f32 %v88, %v56
    %v105 = vmul.f32 %v89, %v57
    %v106 = vmul.f32 %v90, %v58
    %v107 = vmul.f32 %v91, %v59
    %v108 = vmul.f32 %v92, %v60
    %v109 = vmul.f32 %v93, %v61
    %v110 = vmul.f32 %v94, %v62
    %v111 = vmul.f32 %v95, %v63
    %v112 = vmul.f32 %v96, %v64
    %v113 = vmul.f32 %v97, %v65
    %v114 = vmul.f32 %v98, %v66
    %v115 = vmul.f32 %v99, %v67
    %v116 = vmul.f32 %v100, %v68
    %117 = vadd.xlane.f32.xlu0 %v101
    %v118 = vpop.xlane.xlu0 %117
    %119 = vadd.xlane.f32.xlu0 %v102
    %v120 = vpop.xlane.xlu0 %119
    %121 = vadd.xlane.f32.xlu0 %v103
    %v122 = vpop.xlane.xlu0 %121
    %123 = vadd.xlane.f32.xlu0 %v104
    %v124 = vpop.xlane.xlu0 %123
    %125 = vadd.xlane.f32.xlu0 %v105
    %v126 = vpop.xlane.xlu0 %125
    %127 = vadd.xlane.f32.xlu0 %v106
    %v128 = vpop.xlane.xlu0 %127
    %129 = vadd.xlane.f32.xlu0 %v107
    %v130 = vpop.xlane.xlu0 %129
    %131 = vadd.xlane.f32.xlu0 %v108
    %v132 = vpop.xlane.xlu0 %131
    %133 = vadd.xlane.f32.xlu0 %v109
    %v134 = vpop.xlane.xlu0 %133
    %135 = vadd.xlane.f32.xlu0 %v110
    %v136 = vpop.xlane.xlu0 %135
    %137 = vadd.xlane.f32.xlu0 %v111
    %v138 = vpop.xlane.xlu0 %137
    %139 = vadd.xlane.f32.xlu0 %v112
    %v140 = vpop.xlane.xlu0 %139
    %141 = vadd.xlane.f32.xlu0 %v113
    %v142 = vpop.xlane.xlu0 %141
    %143 = vadd.xlane.f32.xlu0 %v114
    %v144 = vpop.xlane.xlu0 %143
    %145 = vadd.xlane.f32.xlu0 %v115
    %v146 = vpop.xlane.xlu0 %145
    %147 = vadd.xlane.f32.xlu0 %v116
    %v148 = vpop.xlane.xlu0 %147
    %v149 = vmul.f32 %v69, %v118
    %v150 = vmul.f32 %v70, %v120
    %v151 = vmul.f32 %v71, %v122
    %v152 = vmul.f32 %v72, %v124
    %v153 = vmul.f32 %v73, %v126
    %v154 = vmul.f32 %v74, %v128
    %v155 = vmul.f32 %v75, %v130
    %v156 = vmul.f32 %v76, %v132
    %v157 = vmul.f32 %v77, %v134
    %v158 = vmul.f32 %v78, %v136
    %v159 = vmul.f32 %v79, %v138
    %v160 = vmul.f32 %v80, %v140
    %v161 = vmul.f32 %v81, %v142
    %v162 = vmul.f32 %v82, %v144
    %v163 = vmul.f32 %v83, %v146
    %v164 = vmul.f32 %v84, %v148
    %v165 = vmin.f32 %v149, 0.0
    %v166 = vmin.f32 %v150, 0.0
    %v167 = vmin.f32 %v151, 0.0
    %v168 = vmin.f32 %v152, 0.0
    %v169 = vmin.f32 %v153, 0.0
    %v170 = vmin.f32 %v154, 0.0
    %v171 = vmin.f32 %v155, 0.0
    %v172 = vmin.f32 %v156, 0.0
    %v173 = vmin.f32 %v157, 0.0
    %v174 = vmin.f32 %v158, 0.0
    %v175 = vmin.f32 %v159, 0.0
    %v176 = vmin.f32 %v160, 0.0
    %v177 = vmin.f32 %v161, 0.0
    %v178 = vmin.f32 %v162, 0.0
    %v179 = vmin.f32 %v163, 0.0
    %v180 = vmin.f32 %v164, 0.0
    %v181 = vand.u32 2147483647, %v149
    %v182 = vand.u32 2147483647, %v150
    %v183 = vand.u32 2147483647, %v151
    %v184 = vand.u32 2147483647, %v152
    %v185 = vand.u32 2147483647, %v153
    %v186 = vand.u32 2147483647, %v154
    %v187 = vand.u32 2147483647, %v155
    %v188 = vand.u32 2147483647, %v156
    %v189 = vand.u32 2147483647, %v157
    %v190 = vand.u32 2147483647, %v158
    %v191 = vand.u32 2147483647, %v159
    %v192 = vand.u32 2147483647, %v160
    %v193 = vand.u32 2147483647, %v161
    %v194 = vand.u32 2147483647, %v162
    %v195 = vand.u32 2147483647, %v163
    %v196 = vand.u32 2147483647, %v164
    %v197 = vsub.f32 0.0, %v181
    %v198 = vsub.f32 0.0, %v182
    %v199 = vsub.f32 0.0, %v183
    %v200 = vsub.f32 0.0, %v184
    %v201 = vsub.f32 0.0, %v185
    %v202 = vsub.f32 0.0, %v186
    %v203 = vsub.f32 0.0, %v187
    %v204 = vsub.f32 0.0, %v188
    %v205 = vsub.f32 0.0, %v189
    %v206 = vsub.f32 0.0, %v190
    %v207 = vsub.f32 0.0, %v191
    %v208 = vsub.f32 0.0, %v192
    %v209 = vsub.f32 0.0, %v193
    %v210 = vsub.f32 0.0, %v194
    %v211 = vsub.f32 0.0, %v195
    %v212 = vsub.f32 0.0, %v196
    %v213 = vmul.f32 %v197, 1.442695
    %v214 = vpow.pop %v213
    %v215 = vmul.f32 %v198, 1.442695
    %v216 = vpow.pop %v215
    %v217 = vmul.f32 %v199, 1.442695
    %v218 = vpow.pop %v217
    %v219 = vmul.f32 %v200, 1.442695
    %v220 = vpow.pop %v219
    %v221 = vmul.f32 %v201, 1.442695
    %v222 = vpow.pop %v221
    %v223 = vmul.f32 %v202, 1.442695
    %v224 = vpow.pop %v223
    %v225 = vmul.f32 %v203, 1.442695
    %v226 = vpow.pop %v225
    %v227 = vmul.f32 %v204, 1.442695
    %v228 = vpow.pop %v227
    %v229 = vmul.f32 %v205, 1.442695
    %v230 = vpow.pop %v229
    %v231 = vmul.f32 %v206, 1.442695
    %v232 = vpow.pop %v231
    %v233 = vmul.f32 %v207, 1.442695
    %v234 = vpow.pop %v233
    %v235 = vmul.f32 %v208, 1.442695
    %v236 = vpow.pop %v235
    %v237 = vmul.f32 %v209, 1.442695
    %v238 = vpow.pop %v237
    %v239 = vmul.f32 %v210, 1.442695
    %v240 = vpow.pop %v239
    %v241 = vmul.f32 %v211, 1.442695
    %v242 = vpow.pop %v241
    %v243 = vmul.f32 %v212, 1.442695
    %v244 = vpow.pop %v243
    %v245 = vadd.f32 %v214, 1.0
    %v246 = vlog2.pop %v245
    %v247 = vmul.f32 %v246, 0.6931472
    %v248 = vmul.f32 -0.5, %v214
    %v249 = vadd.f32 %v248, 1.0
    %v250 = vmul.f32 %v249, %v214
    %v251 = vand.u32 2147483647, %v214
    %vm252 = vcmp.lt.f32.partialorder %v251, 0.0004427343
    %v253 = vsel %vm252, %v250, %v247
    %v254 = vadd.f32 %v216, 1.0
    %v255 = vlog2.pop %v254
    %v256 = vmul.f32 %v255, 0.6931472
    %v257 = vmul.f32 -0.5, %v216
    %v258 = vadd.f32 %v257, 1.0
    %v259 = vmul.f32 %v258, %v216
    %v260 = vand.u32 2147483647, %v216
    %vm261 = vcmp.lt.f32.partialorder %v260, 0.0004427343
    %v262 = vsel %vm261, %v259, %v256
    %v263 = vadd.f32 %v218, 1.0
    %v264 = vlog2.pop %v263
    %v265 = vmul.f32 %v264, 0.6931472
    %v266 = vmul.f32 -0.5, %v218
    %v267 = vadd.f32 %v266, 1.0
    %v268 = vmul.f32 %v267, %v218
    %v269 = vand.u32 2147483647, %v218
    %vm270 = vcmp.lt.f32.partialorder %v269, 0.0004427343
    %v271 = vsel %vm270, %v268, %v265
    %v272 = vadd.f32 %v220, 1.0
    %v273 = vlog2.pop %v272
    %v274 = vmul.f32 %v273, 0.6931472
    %v275 = vmul.f32 -0.5, %v220
    %v276 = vadd.f32 %v275, 1.0
    %v277 = vmul.f32 %v276, %v220
    %v278 = vand.u32 2147483647, %v220
    %vm279 = vcmp.lt.f32.partialorder %v278, 0.0004427343
    %v280 = vsel %vm279, %v277, %v274
    %v281 = vadd.f32 %v222, 1.0
    %v282 = vlog2.pop %v281
    %v283 = vmul.f32 %v282, 0.6931472
    %v284 = vmul.f32 -0.5, %v222
    %v285 = vadd.f32 %v284, 1.0
    %v286 = vmul.f32 %v285, %v222
    %v287 = vand.u32 2147483647, %v222
    %vm288 = vcmp.lt.f32.partialorder %v287, 0.0004427343
    %v289 = vsel %vm288, %v286, %v283
    %v290 = vadd.f32 %v224, 1.0
    %v291 = vlog2.pop %v290
    %v292 = vmul.f32 %v291, 0.6931472
    %v293 = vmul.f32 -0.5, %v224
    %v294 = vadd.f32 %v293, 1.0
    %v295 = vmul.f32 %v294, %v224
    %v296 = vand.u32 2147483647, %v224
    %vm297 = vcmp.lt.f32.partialorder %v296, 0.0004427343
    %v298 = vsel %vm297, %v295, %v292
    %v299 = vadd.f32 %v226, 1.0
    %v300 = vlog2.pop %v299
    %v301 = vmul.f32 %v300, 0.6931472
    %v302 = vmul.f32 -0.5, %v226
    %v303 = vadd.f32 %v302, 1.0
    %v304 = vmul.f32 %v303, %v226
    %v305 = vand.u32 2147483647, %v226
    %vm306 = vcmp.lt.f32.partialorder %v305, 0.0004427343
    %v307 = vsel %vm306, %v304, %v301
    %v308 = vadd.f32 %v228, 1.0
    %v309 = vlog2.pop %v308
    %v310 = vmul.f32 %v309, 0.6931472
    %v311 = vmul.f32 -0.5, %v228
    %v312 = vadd.f32 %v311, 1.0
    %v313 = vmul.f32 %v312, %v228
    %v314 = vand.u32 2147483647, %v228
    %vm315 = vcmp.lt.f32.partialorder %v314, 0.0004427343
    %v316 = vsel %vm315, %v313, %v310
    %v317 = vadd.f32 %v230, 1.0
    %v318 = vlog2.pop %v317
    %v319 = vmul.f32 %v318, 0.6931472
    %v320 = vmul.f32 -0.5, %v230
    %v321 = vadd.f32 %v320, 1.0
    %v322 = vmul.f32 %v321, %v230
    %v323 = vand.u32 2147483647, %v230
    %vm324 = vcmp.lt.f32.partialorder %v323, 0.0004427343
    %v325 = vsel %vm324, %v322, %v319
    %v326 = vadd.f32 %v232, 1.0
    %v327 = vlog2.pop %v326
    %v328 = vmul.f32 %v327, 0.6931472
    %v329 = vmul.f32 -0.5, %v232
    %v330 = vadd.f32 %v329, 1.0
    %v331 = vmul.f32 %v330, %v232
    %v332 = vand.u32 2147483647, %v232
    %vm333 = vcmp.lt.f32.partialorder %v332, 0.0004427343
    %v334 = vsel %vm333, %v331, %v328
    %v335 = vadd.f32 %v234, 1.0
    %v336 = vlog2.pop %v335
    %v337 = vmul.f32 %v336, 0.6931472
    %v338 = vmul.f32 -0.5, %v234
    %v339 = vadd.f32 %v338, 1.0
    %v340 = vmul.f32 %v339, %v234
    %v341 = vand.u32 2147483647, %v234
    %vm342 = vcmp.lt.f32.partialorder %v341, 0.0004427343
    %v343 = vsel %vm342, %v340, %v337
    %v344 = vadd.f32 %v236, 1.0
    %v345 = vlog2.pop %v344
    %v346 = vmul.f32 %v345, 0.6931472
    %v347 = vmul.f32 -0.5, %v236
    %v348 = vadd.f32 %v347, 1.0
    %v349 = vmul.f32 %v348, %v236
    %v350 = vand.u32 2147483647, %v236
    %vm351 = vcmp.lt.f32.partialorder %v350, 0.0004427343
    %v352 = vsel %vm351, %v349, %v346
    %v353 = vadd.f32 %v238, 1.0
    %v354 = vlog2.pop %v353
    %v355 = vmul.f32 %v354, 0.6931472
    %v356 = vmul.f32 -0.5, %v238
    %v357 = vadd.f32 %v356, 1.0
    %v358 = vmul.f32 %v357, %v238
    %v359 = vand.u32 2147483647, %v238
    %vm360 = vcmp.lt.f32.partialorder %v359, 0.0004427343
    %v361 = vsel %vm360, %v358, %v355
    %v362 = vadd.f32 %v240, 1.0
    %v363 = vlog2.pop %v362
    %v364 = vmul.f32 %v363, 0.6931472
    %v365 = vmul.f32 -0.5, %v240
    %v366 = vadd.f32 %v365, 1.0
    %v367 = vmul.f32 %v366, %v240
    %v368 = vand.u32 2147483647, %v240
    %vm369 = vcmp.lt.f32.partialorder %v368, 0.0004427343
    %v370 = vsel %vm369, %v367, %v364
    %v371 = vadd.f32 %v242, 1.0
    %v372 = vlog2.pop %v371
    %v373 = vmul.f32 %v372, 0.6931472
    %v374 = vmul.f32 -0.5, %v242
    %v375 = vadd.f32 %v374, 1.0
    %v376 = vmul.f32 %v375, %v242
    %v377 = vand.u32 2147483647, %v242
    %vm378 = vcmp.lt.f32.partialorder %v377, 0.0004427343
    %v379 = vsel %vm378, %v376, %v373
    %v380 = vadd.f32 %v244, 1.0
    %v381 = vlog2.pop %v380
    %v382 = vmul.f32 %v381, 0.6931472
    %v383 = vmul.f32 -0.5, %v244
    %v384 = vadd.f32 %v383, 1.0
    %v385 = vmul.f32 %v384, %v244
    %v386 = vand.u32 2147483647, %v244
    %vm387 = vcmp.lt.f32.partialorder %v386, 0.0004427343
    %v388 = vsel %vm387, %v385, %v382
    %v389 = vsub.f32 %v165, %v253
    %v390 = vsub.f32 %v166, %v262
    %v391 = vsub.f32 %v167, %v271
    %v392 = vsub.f32 %v168, %v280
    %v393 = vsub.f32 %v169, %v289
    %v394 = vsub.f32 %v170, %v298
    %v395 = vsub.f32 %v171, %v307
    %v396 = vsub.f32 %v172, %v316
    %v397 = vsub.f32 %v173, %v325
    %v398 = vsub.f32 %v174, %v334
    %v399 = vsub.f32 %v175, %v343
    %v400 = vsub.f32 %v176, %v352
    %v401 = vsub.f32 %v177, %v361
    %v402 = vsub.f32 %v178, %v370
    %v403 = vsub.f32 %v179, %v379
    %v404 = vsub.f32 %v180, %v388
    %vm405 = vcmp.ne.f32.partialorder %v69, 0.0
    %vm406 = vcmp.ne.f32.partialorder %v70, 0.0
    %vm407 = vcmp.ne.f32.partialorder %v71, 0.0
    %vm408 = vcmp.ne.f32.partialorder %v72, 0.0
    %vm409 = vcmp.ne.f32.partialorder %v73, 0.0
    %vm410 = vcmp.ne.f32.partialorder %v74, 0.0
    %vm411 = vcmp.ne.f32.partialorder %v75, 0.0
    %vm412 = vcmp.ne.f32.partialorder %v76, 0.0
    %vm413 = vcmp.ne.f32.partialorder %v77, 0.0
    %vm414 = vcmp.ne.f32.partialorder %v78, 0.0
    %vm415 = vcmp.ne.f32.partialorder %v79, 0.0
    %vm416 = vcmp.ne.f32.partialorder %v80, 0.0
    %vm417 = vcmp.ne.f32.partialorder %v81, 0.0
    %vm418 = vcmp.ne.f32.partialorder %v82, 0.0
    %vm419 = vcmp.ne.f32.partialorder %v83, 0.0
    %vm420 = vcmp.ne.f32.partialorder %v84, 0.0
    %v421 = vsel %vm405, %v389, 0.0
    %v422 = vsel %vm406, %v390, 0.0
    %v423 = vsel %vm407, %v391, 0.0
    %v424 = vsel %vm408, %v392, 0.0
    %v425 = vsel %vm409, %v393, 0.0
    %v426 = vsel %vm410, %v394, 0.0
    %v427 = vsel %vm411, %v395, 0.0
    %v428 = vsel %vm412, %v396, 0.0
    %v429 = vsel %vm413, %v397, 0.0
    %v430 = vsel %vm414, %v398, 0.0
    %v431 = vsel %vm415, %v399, 0.0
    %v432 = vsel %vm416, %v400, 0.0
    %v433 = vsel %vm417, %v401, 0.0
    %v434 = vsel %vm418, %v402, 0.0
    %v435 = vsel %vm419, %v403, 0.0
    %v436 = vsel %vm420, %v404, 0.0
    %v437 = vadd.f32 %v421, 0.0
    %v438 = vadd.f32 %v422, 0.0
    %v439 = vadd.f32 %v423, 0.0
    %v440 = vadd.f32 %v424, 0.0
    %v441 = vadd.f32 %v425, 0.0
    %v442 = vadd.f32 %v426, 0.0
    %v443 = vadd.f32 %v427, 0.0
    %v444 = vadd.f32 %v428, 0.0
    %v445 = vadd.f32 %v429, 0.0
    %v446 = vadd.f32 %v430, 0.0
    %v447 = vadd.f32 %v431, 0.0
    %v448 = vadd.f32 %v432, 0.0
    %v449 = vadd.f32 %v433, 0.0
    %v450 = vadd.f32 %v434, 0.0
    %v451 = vadd.f32 %v435, 0.0
    %v452 = vadd.f32 %v436, 0.0
    %v453 = vld [vmem:[#allocation3 + $0x80] sm:$0xff]
    %v454 = vld [vmem:[#allocation3 + $0x88] sm:$0xff]
    %v455 = vld [vmem:[#allocation3 + $0x90] sm:$0xff]
    %v456 = vld [vmem:[#allocation3 + $0x98] sm:$0xff]
    %v457 = vld [vmem:[#allocation3 + $0xa0] sm:$0xff]
    %v458 = vld [vmem:[#allocation3 + $0xa8] sm:$0xff]
    %v459 = vld [vmem:[#allocation3 + $0xb0] sm:$0xff]
    %v460 = vld [vmem:[#allocation3 + $0xb8] sm:$0xff]
    %v461 = vld [vmem:[#allocation3 + $0xc0] sm:$0xff]
    %v462 = vld [vmem:[#allocation3 + $0xc8] sm:$0xff]
    %v463 = vld [vmem:[#allocation3 + $0xd0] sm:$0xff]
    %v464 = vld [vmem:[#allocation3 + $0xd8] sm:$0xff]
    %v465 = vld [vmem:[#allocation3 + $0xe0] sm:$0xff]
    %v466 = vld [vmem:[#allocation3 + $0xe8] sm:$0xff]
    %v467 = vld [vmem:[#allocation3 + $0xf0] sm:$0xff]
    %v468 = vld [vmem:[#allocation3 + $0xf8] sm:$0xff]
    %v469 = vmul.f32 %v453, %v53
    %v470 = vmul.f32 %v454, %v54
    %v471 = vmul.f32 %v455, %v55
    %v472 = vmul.f32 %v456, %v56
    %v473 = vmul.f32 %v457, %v57
    %v474 = vmul.f32 %v458, %v58
    %v475 = vmul.f32 %v459, %v59
    %v476 = vmul.f32 %v460, %v60
    %v477 = vmul.f32 %v461, %v61
    %v478 = vmul.f32 %v462, %v62
    %v479 = vmul.f32 %v463, %v63
    %v480 = vmul.f32 %v464, %v64
    %v481 = vmul.f32 %v465, %v65
    %v482 = vmul.f32 %v466, %v66
    %v483 = vmul.f32 %v467, %v67
    %v484 = vmul.f32 %v468, %v68
    %485 = vadd.xlane.f32.xlu0 %v469
    %v486 = vpop.xlane.xlu0 %485
    %487 = vadd.xlane.f32.xlu0 %v470
    %v488 = vpop.xlane.xlu0 %487
    %489 = vadd.xlane.f32.xlu0 %v471
    %v490 = vpop.xlane.xlu0 %489
    %491 = vadd.xlane.f32.xlu0 %v472
    %v492 = vpop.xlane.xlu0 %491
    %493 = vadd.xlane.f32.xlu0 %v473
    %v494 = vpop.xlane.xlu0 %493
    %495 = vadd.xlane.f32.xlu0 %v474
    %v496 = vpop.xlane.xlu0 %495
    %497 = vadd.xlane.f32.xlu0 %v475
    %v498 = vpop.xlane.xlu0 %497
    %499 = vadd.xlane.f32.xlu0 %v476
    %v500 = vpop.xlane.xlu0 %499
    %501 = vadd.xlane.f32.xlu0 %v477
    %v502 = vpop.xlane.xlu0 %501
    %503 = vadd.xlane.f32.xlu0 %v478
    %v504 = vpop.xlane.xlu0 %503
    %505 = vadd.xlane.f32.xlu0 %v479
    %v506 = vpop.xlane.xlu0 %505
    %507 = vadd.xlane.f32.xlu0 %v480
    %v508 = vpop.xlane.xlu0 %507
    %509 = vadd.xlane.f32.xlu0 %v481
    %v510 = vpop.xlane.xlu0 %509
    %511 = vadd.xlane.f32.xlu0 %v482
    %v512 = vpop.xlane.xlu0 %511
    %513 = vadd.xlane.f32.xlu0 %v483
    %v514 = vpop.xlane.xlu0 %513
    %515 = vadd.xlane.f32.xlu0 %v484
    %v516 = vpop.xlane.xlu0 %515
    %v517 = vmul.f32 %v69, %v486
    %v518 = vmul.f32 %v70, %v488
    %v519 = vmul.f32 %v71, %v490
    %v520 = vmul.f32 %v72, %v492
    %v521 = vmul.f32 %v73, %v494
    %v522 = vmul.f32 %v74, %v496
    %v523 = vmul.f32 %v75, %v498
    %v524 = vmul.f32 %v76, %v500
    %v525 = vmul.f32 %v77, %v502
    %v526 = vmul.f32 %v78, %v504
    %v527 = vmul.f32 %v79, %v506
    %v528 = vmul.f32 %v80, %v508
    %v529 = vmul.f32 %v81, %v510
    %v530 = vmul.f32 %v82, %v512
    %v531 = vmul.f32 %v83, %v514
    %v532 = vmul.f32 %v84, %v516
    %v533 = vmin.f32 %v517, 0.0
    %v534 = vmin.f32 %v518, 0.0
    %v535 = vmin.f32 %v519, 0.0
    %v536 = vmin.f32 %v520, 0.0
    %v537 = vmin.f32 %v521, 0.0
    %v538 = vmin.f32 %v522, 0.0
    %v539 = vmin.f32 %v523, 0.0
    %v540 = vmin.f32 %v524, 0.0
    %v541 = vmin.f32 %v525, 0.0
    %v542 = vmin.f32 %v526, 0.0
    %v543 = vmin.f32 %v527, 0.0
    %v544 = vmin.f32 %v528, 0.0
    %v545 = vmin.f32 %v529, 0.0
    %v546 = vmin.f32 %v530, 0.0
    %v547 = vmin.f32 %v531, 0.0
    %v548 = vmin.f32 %v532, 0.0
    %v549 = vand.u32 2147483647, %v517
    %v550 = vand.u32 2147483647, %v518
    %v551 = vand.u32 2147483647, %v519
    %v552 = vand.u32 2147483647, %v520
    %v553 = vand.u32 2147483647, %v521
    %v554 = vand.u32 2147483647, %v522
    %v555 = vand.u32 2147483647, %v523
    %v556 = vand.u32 2147483647, %v524
    %v557 = vand.u32 2147483647, %v525
    %v558 = vand.u32 2147483647, %v526
    %v559 = vand.u32 2147483647, %v527
    %v560 = vand.u32 2147483647, %v528
    %v561 = vand.u32 2147483647, %v529
    %v562 = vand.u32 2147483647, %v530
    %v563 = vand.u32 2147483647, %v531
    %v564 = vand.u32 2147483647, %v532
    %v565 = vsub.f32 0.0, %v549
    %v566 = vsub.f32 0.0, %v550
    %v567 = vsub.f32 0.0, %v551
    %v568 = vsub.f32 0.0, %v552
    %v569 = vsub.f32 0.0, %v553
    %v570 = vsub.f32 0.0, %v554
    %v571 = vsub.f32 0.0, %v555
    %v572 = vsub.f32 0.0, %v556
    %v573 = vsub.f32 0.0, %v557
    %v574 = vsub.f32 0.0, %v558
    %v575 = vsub.f32 0.0, %v559
    %v576 = vsub.f32 0.0, %v560
    %v577 = vsub.f32 0.0, %v561
    %v578 = vsub.f32 0.0, %v562
    %v579 = vsub.f32 0.0, %v563
    %v580 = vsub.f32 0.0, %v564
    %v581 = vmul.f32 %v565, 1.442695
    %v582 = vpow.pop %v581
    %v583 = vmul.f32 %v566, 1.442695
    %v584 = vpow.pop %v583
    %v585 = vmul.f32 %v567, 1.442695
    %v586 = vpow.pop %v585
    %v587 = vmul.f32 %v568, 1.442695
    %v588 = vpow.pop %v587
    %v589 = vmul.f32 %v569, 1.442695
    %v590 = vpow.pop %v589
    %v591 = vmul.f32 %v570, 1.442695
    %v592 = vpow.pop %v591
    %v593 = vmul.f32 %v571, 1.442695
    %v594 = vpow.pop %v593
    %v595 = vmul.f32 %v572, 1.442695
    %v596 = vpow.pop %v595
    %v597 = vmul.f32 %v573, 1.442695
    %v598 = vpow.pop %v597
    %v599 = vmul.f32 %v574, 1.442695
    %v600 = vpow.pop %v599
    %v601 = vmul.f32 %v575, 1.442695
    %v602 = vpow.pop %v601
    %v603 = vmul.f32 %v576, 1.442695
    %v604 = vpow.pop %v603
    %v605 = vmul.f32 %v577, 1.442695
    %v606 = vpow.pop %v605
    %v607 = vmul.f32 %v578, 1.442695
    %v608 = vpow.pop %v607
    %v609 = vmul.f32 %v579, 1.442695
    %v610 = vpow.pop %v609
    %v611 = vmul.f32 %v580, 1.442695
    %v612 = vpow.pop %v611
    %v613 = vadd.f32 %v582, 1.0
    %v614 = vlog2.pop %v613
    %v615 = vmul.f32 %v614, 0.6931472
    %v616 = vmul.f32 -0.5, %v582
    %v617 = vadd.f32 %v616, 1.0
    %v618 = vmul.f32 %v617, %v582
    %v619 = vand.u32 2147483647, %v582
    %vm620 = vcmp.lt.f32.partialorder %v619, 0.0004427343
    %v621 = vsel %vm620, %v618, %v615
    %v622 = vadd.f32 %v584, 1.0
    %v623 = vlog2.pop %v622
    %v624 = vmul.f32 %v623, 0.6931472
    %v625 = vmul.f32 -0.5, %v584
    %v626 = vadd.f32 %v625, 1.0
    %v627 = vmul.f32 %v626, %v584
    %v628 = vand.u32 2147483647, %v584
    %vm629 = vcmp.lt.f32.partialorder %v628, 0.0004427343
    %v630 = vsel %vm629, %v627, %v624
    %v631 = vadd.f32 %v586, 1.0
    %v632 = vlog2.pop %v631
    %v633 = vmul.f32 %v632, 0.6931472
    %v634 = vmul.f32 -0.5, %v586
    %v635 = vadd.f32 %v634, 1.0
    %v636 = vmul.f32 %v635, %v586
    %v637 = vand.u32 2147483647, %v586
    %vm638 = vcmp.lt.f32.partialorder %v637, 0.0004427343
    %v639 = vsel %vm638, %v636, %v633
    %v640 = vadd.f32 %v588, 1.0
    %v641 = vlog2.pop %v640
    %v642 = vmul.f32 %v641, 0.6931472
    %v643 = vmul.f32 -0.5, %v588
    %v644 = vadd.f32 %v643, 1.0
    %v645 = vmul.f32 %v644, %v588
    %v646 = vand.u32 2147483647, %v588
    %vm647 = vcmp.lt.f32.partialorder %v646, 0.0004427343
    %v648 = vsel %vm647, %v645, %v642
    %v649 = vadd.f32 %v590, 1.0
    %v650 = vlog2.pop %v649
    %v651 = vmul.f32 %v650, 0.6931472
    %v652 = vmul.f32 -0.5, %v590
    %v653 = vadd.f32 %v652, 1.0
    %v654 = vmul.f32 %v653, %v590
    %v655 = vand.u32 2147483647, %v590
    %vm656 = vcmp.lt.f32.partialorder %v655, 0.0004427343
    %v657 = vsel %vm656, %v654, %v651
    %v658 = vadd.f32 %v592, 1.0
    %v659 = vlog2.pop %v658
    %v660 = vmul.f32 %v659, 0.6931472
    %v661 = vmul.f32 -0.5, %v592
    %v662 = vadd.f32 %v661, 1.0
    %v663 = vmul.f32 %v662, %v592
    %v664 = vand.u32 2147483647, %v592
    %vm665 = vcmp.lt.f32.partialorder %v664, 0.0004427343
    %v666 = vsel %vm665, %v663, %v660
    %v667 = vadd.f32 %v594, 1.0
    %v668 = vlog2.pop %v667
    %v669 = vmul.f32 %v668, 0.6931472
    %v670 = vmul.f32 -0.5, %v594
    %v671 = vadd.f32 %v670, 1.0
    %v672 = vmul.f32 %v671, %v594
    %v673 = vand.u32 2147483647, %v594
    %vm674 = vcmp.lt.f32.partialorder %v673, 0.0004427343
    %v675 = vsel %vm674, %v672, %v669
    %v676 = vadd.f32 %v596, 1.0
    %v677 = vlog2.pop %v676
    %v678 = vmul.f32 %v677, 0.6931472
    %v679 = vmul.f32 -0.5, %v596
    %v680 = vadd.f32 %v679, 1.0
    %v681 = vmul.f32 %v680, %v596
    %v682 = vand.u32 2147483647, %v596
    %vm683 = vcmp.lt.f32.partialorder %v682, 0.0004427343
    %v684 = vsel %vm683, %v681, %v678
    %v685 = vadd.f32 %v598, 1.0
    %v686 = vlog2.pop %v685
    %v687 = vmul.f32 %v686, 0.6931472
    %v688 = vmul.f32 -0.5, %v598
    %v689 = vadd.f32 %v688, 1.0
    %v690 = vmul.f32 %v689, %v598
    %v691 = vand.u32 2147483647, %v598
    %vm692 = vcmp.lt.f32.partialorder %v691, 0.0004427343
    %v693 = vsel %vm692, %v690, %v687
    %v694 = vadd.f32 %v600, 1.0
    %v695 = vlog2.pop %v694
    %v696 = vmul.f32 %v695, 0.6931472
    %v697 = vmul.f32 -0.5, %v600
    %v698 = vadd.f32 %v697, 1.0
    %v699 = vmul.f32 %v698, %v600
    %v700 = vand.u32 2147483647, %v600
    %vm701 = vcmp.lt.f32.partialorder %v700, 0.0004427343
    %v702 = vsel %vm701, %v699, %v696
    %v703 = vadd.f32 %v602, 1.0
    %v704 = vlog2.pop %v703
    %v705 = vmul.f32 %v704, 0.6931472
    %v706 = vmul.f32 -0.5, %v602
    %v707 = vadd.f32 %v706, 1.0
    %v708 = vmul.f32 %v707, %v602
    %v709 = vand.u32 2147483647, %v602
    %vm710 = vcmp.lt.f32.partialorder %v709, 0.0004427343
    %v711 = vsel %vm710, %v708, %v705
    %v712 = vadd.f32 %v604, 1.0
    %v713 = vlog2.pop %v712
    %v714 = vmul.f32 %v713, 0.6931472
    %v715 = vmul.f32 -0.5, %v604
    %v716 = vadd.f32 %v715, 1.0
    %v717 = vmul.f32 %v716, %v604
    %v718 = vand.u32 2147483647, %v604
    %vm719 = vcmp.lt.f32.partialorder %v718, 0.0004427343
    %v720 = vsel %vm719, %v717, %v714
    %v721 = vadd.f32 %v606, 1.0
    %v722 = vlog2.pop %v721
    %v723 = vmul.f32 %v722, 0.6931472
    %v724 = vmul.f32 -0.5, %v606
    %v725 = vadd.f32 %v724, 1.0
    %v726 = vmul.f32 %v725, %v606
    %v727 = vand.u32 2147483647, %v606
    %vm728 = vcmp.lt.f32.partialorder %v727, 0.0004427343
    %v729 = vsel %vm728, %v726, %v723
    %v730 = vadd.f32 %v608, 1.0
    %v731 = vlog2.pop %v730
    %v732 = vmul.f32 %v731, 0.6931472
    %v733 = vmul.f32 -0.5, %v608
    %v734 = vadd.f32 %v733, 1.0
    %v735 = vmul.f32 %v734, %v608
    %v736 = vand.u32 2147483647, %v608
    %vm737 = vcmp.lt.f32.partialorder %v736, 0.0004427343
    %v738 = vsel %vm737, %v735, %v732
    %v739 = vadd.f32 %v610, 1.0
    %v740 = vlog2.pop %v739
    %v741 = vmul.f32 %v740, 0.6931472
    %v742 = vmul.f32 -0.5, %v610
    %v743 = vadd.f32 %v742, 1.0
    %v744 = vmul.f32 %v743, %v610
    %v745 = vand.u32 2147483647, %v610
    %vm746 = vcmp.lt.f32.partialorder %v745, 0.0004427343
    %v747 = vsel %vm746, %v744, %v741
    %v748 = vadd.f32 %v612, 1.0
    %v749 = vlog2.pop %v748
    %v750 = vmul.f32 %v749, 0.6931472
    %v751 = vmul.f32 -0.5, %v612
    %v752 = vadd.f32 %v751, 1.0
    %v753 = vmul.f32 %v752, %v612
    %v754 = vand.u32 2147483647, %v612
    %vm755 = vcmp.lt.f32.partialorder %v754, 0.0004427343
    %v756 = vsel %vm755, %v753, %v750
    %v757 = vsub.f32 %v533, %v621
    %v758 = vsub.f32 %v534, %v630
    %v759 = vsub.f32 %v535, %v639
    %v760 = vsub.f32 %v536, %v648
    %v761 = vsub.f32 %v537, %v657
    %v762 = vsub.f32 %v538, %v666
    %v763 = vsub.f32 %v539, %v675
    %v764 = vsub.f32 %v540, %v684
    %v765 = vsub.f32 %v541, %v693
    %v766 = vsub.f32 %v542, %v702
    %v767 = vsub.f32 %v543, %v711
    %v768 = vsub.f32 %v544, %v720
    %v769 = vsub.f32 %v545, %v729
    %v770 = vsub.f32 %v546, %v738
    %v771 = vsub.f32 %v547, %v747
    %v772 = vsub.f32 %v548, %v756
    %v773 = vsel %vm405, %v757, 0.0
    %v774 = vsel %vm406, %v758, 0.0
    %v775 = vsel %vm407, %v759, 0.0
    %v776 = vsel %vm408, %v760, 0.0
    %v777 = vsel %vm409, %v761, 0.0
    %v778 = vsel %vm410, %v762, 0.0
    %v779 = vsel %vm411, %v763, 0.0
    %v780 = vsel %vm412, %v764, 0.0
    %v781 = vsel %vm413, %v765, 0.0
    %v782 = vsel %vm414, %v766, 0.0
    %v783 = vsel %vm415, %v767, 0.0
    %v784 = vsel %vm416, %v768, 0.0
    %v785 = vsel %vm417, %v769, 0.0
    %v786 = vsel %vm418, %v770, 0.0
    %v787 = vsel %vm419, %v771, 0.0
    %v788 = vsel %vm420, %v772, 0.0
    %805 = vrot.lane.b32.xlu0 %v773, 127
    %v806 = vpop.permute.xlu0 %805
    %807 = vrot.lane.b32.xlu0 %v774, 127
    %v808 = vpop.permute.xlu0 %807
    %809 = vrot.lane.b32.xlu0 %v775, 127
    %v810 = vpop.permute.xlu0 %809
    %811 = vrot.lane.b32.xlu0 %v776, 127
    %v812 = vpop.permute.xlu0 %811
    %813 = vrot.lane.b32.xlu0 %v777, 127
    %v814 = vpop.permute.xlu0 %813
    %815 = vrot.lane.b32.xlu0 %v778, 127
    %v816 = vpop.permute.xlu0 %815
    %817 = vrot.lane.b32.xlu0 %v779, 127
    %v818 = vpop.permute.xlu0 %817
    %819 = vrot.lane.b32.xlu0 %v780, 127
    %v820 = vpop.permute.xlu0 %819
    %821 = vrot.lane.b32.xlu0 %v781, 127
    %v822 = vpop.permute.xlu0 %821
    %823 = vrot.lane.b32.xlu0 %v782, 127
    %v824 = vpop.permute.xlu0 %823
    %825 = vrot.lane.b32.xlu0 %v783, 127
    %v826 = vpop.permute.xlu0 %825
    %827 = vrot.lane.b32.xlu0 %v784, 127
    %v828 = vpop.permute.xlu0 %827
    %829 = vrot.lane.b32.xlu0 %v785, 127
    %v830 = vpop.permute.xlu0 %829
    %831 = vrot.lane.b32.xlu0 %v786, 127
    %v832 = vpop.permute.xlu0 %831
    %833 = vrot.lane.b32.xlu0 %v787, 127
    %v834 = vpop.permute.xlu0 %833
    %835 = vrot.lane.b32.xlu0 %v788, 127
    %v836 = vpop.permute.xlu0 %835
    %v853 = vadd.f32 %v437, %v806
    %v854 = vadd.f32 %v438, %v808
    %v855 = vadd.f32 %v439, %v810
    %v856 = vadd.f32 %v440, %v812
    %v857 = vadd.f32 %v441, %v814
    %v858 = vadd.f32 %v442, %v816
    %v859 = vadd.f32 %v443, %v818
    %v860 = vadd.f32 %v444, %v820
    %v861 = vadd.f32 %v445, %v822
    %v862 = vadd.f32 %v446, %v824
    %v863 = vadd.f32 %v447, %v826
    %v864 = vadd.f32 %v448, %v828
    %v865 = vadd.f32 %v449, %v830
    %v866 = vadd.f32 %v450, %v832
    %v867 = vadd.f32 %v451, %v834
    %v868 = vadd.f32 %v452, %v836
    %v869 = vmul.f32 %v853, 1.442695
    %v870 = vpow.pop %v869
    %v871 = vmul.f32 %v854, 1.442695
    %v872 = vpow.pop %v871
    %v873 = vmul.f32 %v855, 1.442695
    %v874 = vpow.pop %v873
    %v875 = vmul.f32 %v856, 1.442695
    %v876 = vpow.pop %v875
    %v877 = vmul.f32 %v857, 1.442695
    %v878 = vpow.pop %v877
    %v879 = vmul.f32 %v858, 1.442695
    %v880 = vpow.pop %v879
    %v881 = vmul.f32 %v859, 1.442695
    %v882 = vpow.pop %v881
    %v883 = vmul.f32 %v860, 1.442695
    %v884 = vpow.pop %v883
    %v885 = vmul.f32 %v861, 1.442695
    %v886 = vpow.pop %v885
    %v887 = vmul.f32 %v862, 1.442695
    %v888 = vpow.pop %v887
    %v889 = vmul.f32 %v863, 1.442695
    %v890 = vpow.pop %v889
    %v891 = vmul.f32 %v864, 1.442695
    %v892 = vpow.pop %v891
    %v893 = vmul.f32 %v865, 1.442695
    %v894 = vpow.pop %v893
    %v895 = vmul.f32 %v866, 1.442695
    %v896 = vpow.pop %v895
    %v897 = vmul.f32 %v867, 1.442695
    %v898 = vpow.pop %v897
    %v899 = vmul.f32 %v868, 1.442695
    %v900 = vpow.pop %v899
    %v901 = vlaneseq
    %v902 = vshrl.u32 %v901, 7
    %v903 = vadd.s32 %v902, 8
    %v904 = vadd.s32 %v902, 16
    %v905 = vadd.s32 %v902, 24
    %v906 = vadd.s32 %v902, 32
    %v907 = vadd.s32 %v902, 40
    %v908 = vadd.s32 %v902, 48
    %v909 = vadd.s32 %v902, 56
    %v910 = vadd.s32 %v902, 64
    %v911 = vadd.s32 %v902, 72
    %v912 = vadd.s32 %v902, 80
    %v913 = vadd.s32 %v902, 88
    %v914 = vadd.s32 %v902, 96
    %v915 = vadd.s32 %v902, 104
    %v916 = vadd.s32 %v902, 112
    %v917 = vadd.s32 %v902, 120
    %v918 = vlaneseq
    %v919 = vand.u32 %v918, 127
    %vm920 = vcmp.eq.s32.totalorder %v902, %v919
    %vm921 = vcmp.eq.s32.totalorder %v903, %v919
    %vm922 = vcmp.eq.s32.totalorder %v904, %v919
    %vm923 = vcmp.eq.s32.totalorder %v905, %v919
    %vm924 = vcmp.eq.s32.totalorder %v906, %v919
    %vm925 = vcmp.eq.s32.totalorder %v907, %v919
    %vm926 = vcmp.eq.s32.totalorder %v908, %v919
    %vm927 = vcmp.eq.s32.totalorder %v909, %v919
    %vm928 = vcmp.eq.s32.totalorder %v910, %v919
    %vm929 = vcmp.eq.s32.totalorder %v911, %v919
    %vm930 = vcmp.eq.s32.totalorder %v912, %v919
    %vm931 = vcmp.eq.s32.totalorder %v913, %v919
    %vm932 = vcmp.eq.s32.totalorder %v914, %v919
    %vm933 = vcmp.eq.s32.totalorder %v915, %v919
    %vm934 = vcmp.eq.s32.totalorder %v916, %v919
    %vm935 = vcmp.eq.s32.totalorder %v917, %v919
    %937 = vset.pattern.permute.xlu0 0
    %938 = vperm.xlu0 %937, %v870
    %v939 = vpop.permute.xlu0 %938
    %942 = vset.pattern.permute.xlu0 0
    %943 = vperm.xlu0 %942, %v872
    %v944 = vpop.permute.xlu0 %943
    %947 = vset.pattern.permute.xlu0 0
    %948 = vperm.xlu0 %947, %v874
    %v949 = vpop.permute.xlu0 %948
    %952 = vset.pattern.permute.xlu0 0
    %953 = vperm.xlu0 %952, %v876
    %v954 = vpop.permute.xlu0 %953
    %957 = vset.pattern.permute.xlu0 0
    %958 = vperm.xlu0 %957, %v878
    %v959 = vpop.permute.xlu0 %958
    %962 = vset.pattern.permute.xlu0 0
    %963 = vperm.xlu0 %962, %v880
    %v964 = vpop.permute.xlu0 %963
    %967 = vset.pattern.permute.xlu0 0
    %968 = vperm.xlu0 %967, %v882
    %v969 = vpop.permute.xlu0 %968
    %972 = vset.pattern.permute.xlu0 0
    %973 = vperm.xlu0 %972, %v884
    %v974 = vpop.permute.xlu0 %973
    %977 = vset.pattern.permute.xlu0 0
    %978 = vperm.xlu0 %977, %v886
    %v979 = vpop.permute.xlu0 %978
    %982 = vset.pattern.permute.xlu0 0
    %983 = vperm.xlu0 %982, %v888
    %v984 = vpop.permute.xlu0 %983
    %987 = vset.pattern.permute.xlu0 0
    %988 = vperm.xlu0 %987, %v890
    %v989 = vpop.permute.xlu0 %988
    %992 = vset.pattern.permute.xlu0 0
    %993 = vperm.xlu0 %992, %v892
    %v994 = vpop.permute.xlu0 %993
    %997 = vset.pattern.permute.xlu0 0
    %998 = vperm.xlu0 %997, %v894
    %v999 = vpop.permute.xlu0 %998
    %1002 = vset.pattern.permute.xlu0 0
    %1003 = vperm.xlu0 %1002, %v896
    %v1004 = vpop.permute.xlu0 %1003
    %1007 = vset.pattern.permute.xlu0 0
    %1008 = vperm.xlu0 %1007, %v898
    %v1009 = vpop.permute.xlu0 %1008
    %1012 = vset.pattern.permute.xlu0 0
    %1013 = vperm.xlu0 %1012, %v900
    %v1014 = vpop.permute.xlu0 %1013
    %v1016 = vsel %vm920, %v939, 0.0
    %v1017 = vsel %vm921, %v944, 0.0
    %v1018 = vsel %vm922, %v949, 0.0
    %v1019 = vsel %vm923, %v954, 0.0
    %v1020 = vsel %vm924, %v959, 0.0
    %v1021 = vsel %vm925, %v964, 0.0
    %v1022 = vsel %vm926, %v969, 0.0
    %v1023 = vsel %vm927, %v974, 0.0
    %v1024 = vsel %vm928, %v979, 0.0
    %v1025 = vsel %vm929, %v984, 0.0
    %v1026 = vsel %vm930, %v989, 0.0
    %v1027 = vsel %vm931, %v994, 0.0
    %v1028 = vsel %vm932, %v999, 0.0
    %v1029 = vsel %vm933, %v1004, 0.0
    %v1030 = vsel %vm934, %v1009, 0.0
    %v1031 = vsel %vm935, %v1014, 0.0
    %v1032 = vadd.f32 %v1016, %v1017
    %v1033 = vadd.f32 %v1032, %v1018
    %v1034 = vadd.f32 %v1033, %v1019
    %v1035 = vadd.f32 %v1034, %v1020
    %v1036 = vadd.f32 %v1035, %v1021
    %v1037 = vadd.f32 %v1036, %v1022
    %v1038 = vadd.f32 %v1037, %v1023
    %v1039 = vadd.f32 %v1038, %v1024
    %v1040 = vadd.f32 %v1039, %v1025
    %v1041 = vadd.f32 %v1040, %v1026
    %v1042 = vadd.f32 %v1041, %v1027
    %v1043 = vadd.f32 %v1042, %v1028
    %v1044 = vadd.f32 %v1043, %v1029
    %v1045 = vadd.f32 %v1044, %v1030
    %v1046 = vadd.f32 %v1045, %v1031
    %v1047 = vrot.slane %v1046, 4
    %v1048 = vadd.f32 %v1046, %v1047
    %v1049 = vrot.slane %v1048, 2
    %v1050 = vadd.f32 %v1048, %v1049
    %v1051 = vrot.slane %v1050, 1
    %v1052 = vadd.f32 %v1050, %v1051
    %1053 = vst [vmem:[#allocation7] sm:$0x1] %v1052
    // Predicated region
    $region21: #{tpu_custom_call.1} parent=1 // pred_check
      _
    $region22: #{tpu_custom_call.1} parent=1 // pred_check_branch
      %1055 = sbr.rel (0) target = $region24
    $region23: #{tpu_custom_call.1} parent=1 // pred_region
      %s1057 = ssub.s32 16, 16
      %1058 = vsyncadd [#allocation8], %s1057
      %s1060 = sshll.u32 [#allocation7], 4
      %s1061 = int_to_ptr.vmem [resolvable:$true] %s1060
      %1063 = dma.vmem_to_hbm [thread:$0]  %s1061, 16, %s5, [#allocation8]
    $region24: #{tpu_custom_call.1} parent=1 // pred_fallthru
      _
    // Predicated region
    $region25: #{tpu_custom_call.1} parent=1 // pred_check
      _
    $region26: #{tpu_custom_call.1} parent=1 // pred_check_branch
      %1065 = sbr.rel (0) target = $region28
    $region27: #{tpu_custom_call.1} parent=1 // pred_region
      %1066 = dma.done [#allocation8], 16
    $region28: #{tpu_custom_call.1} parent=1 // pred_fallthru
      _
    %1067 = vsyncpa [#allocation8], 1

</llo_original>
